<compile_context>
chip_gen: v7x
topology: tpu7x:2x2x1
jax: 0.10.0
libtpu: 0.0.40
codegen_flags: <defaults>
</compile_context>

<pallas_src>
import functools

import numpy as np
import jax
import jax.numpy as jnp
from jax.experimental import pallas as pl
from jax.experimental.pallas import tpu as pltpu

IN_FEATURES = 8     # latent size (module's `in_features`)
OUT_FEATURES = 64   # data size   (module's `out_features`)
BATCH = 8
LANES = 128

# lane offsets used for the packed layout
MU_OFF = 64                    # mu lives in cols [64, 72)
LV_OFF = MU_OFF + IN_FEATURES  # log_var / eps*std live in cols [72, 80)

N_LAYERS = 7  # enc1, enc2, enc3(merged mu|log_var), dec1(merged z|xc), dec2, dec3, dec4


def _default_hidden_dtype():
    """bf16 hidden activations on v6e/v7x (native bf16 VPU/EUP); f32 otherwise."""
    try:
        kind = jax.devices()[0].device_kind.lower()
    except Exception:
        return jnp.float32
    if ("v6" in kind) or ("v7" in kind) or ("7x" in kind) or ("trillium" in kind):
        return jnp.bfloat16
    return jnp.float32


HIDDEN_DTYPE = _default_hidden_dtype()


# ----------------------------------------------------------------------------
# Kernel
# ----------------------------------------------------------------------------
def cvae_kernel(xf_ref, xc_ref, eps_ref, w_ref, b_ref, out_ref, g_ref,
                *, hidden_dtype):
    """xf_ref : (B, 64)        f32  data input
       xc_ref : (B, 8)         f32  condition input
       eps_ref: (B, 128)       f32  N(0,1) noise; only lanes [72,80) are used
       w_ref  : (7, 128, 128)  bf16 packed/padded weights
       b_ref  : (7, 1, 128)    f32  packed/padded biases
       out_ref: (B, 128)       f32  recon cols 0:64 | mu 64:72 | log_var 72:80
       g_ref  : (B, 128)       f32  VMEM scratch for lane-placing xc
    """
    def lin(x, i, out_dtype, rows=LANES):
        w = w_ref[i]
        if rows != LANES:
            w = w[:rows, :]
        b = b_ref[i].astype(out_dtype)     # no-op cast when out_dtype is f32
        return jnp.dot(x.astype(jnp.bfloat16), w,
                       preferred_element_type=out_dtype) + b

    hd = hidden_dtype

    # ---- lane placement of the condition input (off the critical path) ----
    g_ref[...] = jnp.zeros_like(g_ref)
    g_ref[:, :IN_FEATURES] = xc_ref[...]
    xc_p = g_ref[...]                      # xc in lanes 0:8, zeros elsewhere

    eps = eps_ref[...]                     # noise already in kernel lane layout

    # ----- encoder -----
    h = jax.nn.relu(lin(xf_ref[...], 0, hd, rows=OUT_FEATURES))  # -> cols 0:32
    h = jax.nn.relu(lin(h, 1, hd))                               # -> cols 0:16
    mlv = lin(h, 2, jnp.float32)           # merged enc3: mu 64:72 | log_var 72:80

    # ----- reparameterize + cat((z, xc)) via static lane masks -----
    lane = jax.lax.broadcasted_iota(jnp.int32, mlv.shape, 1)
    lv_mask = (lane >= LV_OFF) & (lane < LV_OFF + IN_FEATURES)
    # Guard: keep mu lanes out of exp() (exp(0.5*mu) could overflow -> 0*inf NaN)
    std = jnp.exp(0.5 * jnp.where(lv_mask, mlv, 0.0))
    # u lanes: 0:8 -> xc | 64:72 -> mu | 72:80 -> eps*std | elsewhere 0.
    # dec1's weight duplicates wd1's z-rows at the mu and eps*std row offsets
    # and holds the xc-rows at row 0, so the matmul realizes both the
    # "mu + eps*std" sum and the concat with xc.
    u = jnp.where(lv_mask, eps * std, mlv) + xc_p

    # ----- decoder -----
    h = jax.nn.relu(lin(u, 3, hd))         # dec1 -> cols 0:16
    h = jax.nn.relu(lin(h, 4, hd))         # dec2 -> cols 0:16
    h = jax.nn.relu(lin(h, 5, hd))         # dec3 -> cols 0:32
    recon = lin(h, 6, jnp.float32)         # dec4 -> cols 0:64

    # recon / mu / log_var live in disjoint lane ranges -> one dense store.
    out_ref[...] = recon + mlv


# ----------------------------------------------------------------------------
# Parameter construction / packing (host side, once)
# ----------------------------------------------------------------------------
def init_linear(key, fan_in, fan_out):
    # PyTorch nn.Linear default init: U(-1/sqrt(fan_in), 1/sqrt(fan_in)).
    kw, kb = jax.random.split(key)
    bound = 1.0 / jnp.sqrt(float(fan_in))
    w = jax.random.uniform(kw, (fan_in, fan_out), jnp.float32, -bound, bound)
    b = jax.random.uniform(kb, (fan_out,), jnp.float32, -bound, bound)
    return w, b


def make_params(key):
    of, inf = OUT_FEATURES, IN_FEATURES
    sizes = [
        (of, of // 2),        # enc1
        (of // 2, of // 4),   # enc2
        (of // 4, inf * 2),   # enc3
        (inf * 2, of // 4),   # dec1
        (of // 4, of // 4),   # dec2
        (of // 4, of // 2),   # dec3
        (of // 2, of),        # dec4
    ]
    keys = jax.random.split(key, len(sizes))
    params = []
    for k, (fi, fo) in zip(keys, sizes):
        w, b = init_linear(k, fi, fo)
        params.extend([w, b])
    return params


def pack_params(params):
    """Pack the 7 Linear layers into one padded bf16 weight slab and one f32
    bias slab with the lane/row offsets expected by cvae_kernel."""
    (we1, be1, we2, be2, we3, be3,
     wd1, bd1, wd2, bd2, wd3, bd3, wd4, bd4) = [np.asarray(p) for p in params]
    inf = IN_FEATURES

    W = np.zeros((N_LAYERS, LANES, LANES), np.float32)
    Bv = np.zeros((N_LAYERS, 1, LANES), np.float32)
    w_allowed = np.zeros(W.shape, bool)
    b_allowed = np.zeros(Bv.shape, bool)

    def put(i, w, b=None, row_off=0, col_off=0):
        fi, fo = w.shape
        W[i, row_off:row_off + fi, col_off:col_off + fo] = w
        w_allowed[i, row_off:row_off + fi, col_off:col_off + fo] = True
        if b is not None:
            Bv[i, 0, col_off:col_off + fo] = b
            b_allowed[i, 0, col_off:col_off + fo] = True

    put(0, we1, be1)                                          # enc1
    put(1, we2, be2)                                          # enc2
    # enc3 merged into one slot: mu cols at MU_OFF, log_var cols at LV_OFF
    put(2, we3[:, :inf], be3[:inf], col_off=MU_OFF)
    put(2, we3[:, inf:], be3[inf:], col_off=LV_OFF)
    # dec1: xc-rows at row 0, wd1's z-rows duplicated at mu / eps*std lane rows.
    put(3, wd1[inf:, :], bd1, row_off=0)                      # xc part
    put(3, wd1[:inf, :], None, row_off=MU_OFF)                # mu part
    put(3, wd1[:inf, :], None, row_off=LV_OFF)                # eps*std part
    put(4, wd2, bd2)                                          # dec2
    put(5, wd3, bd3)                                          # dec3
    put(6, wd4, bd4)                                          # dec4

    # Any nonzero value in the padded regions would silently corrupt
    # recon / mu / log_var (the lane-offset tricks rely on exact zeros).
    assert not W[~w_allowed].any(), "nonzero padding in packed weight slab"
    assert not Bv[~b_allowed].any(), "nonzero padding in packed bias slab"

    return jnp.asarray(W, dtype=jnp.bfloat16), jnp.asarray(Bv, dtype=jnp.float32)


# ----------------------------------------------------------------------------
# Forward wrapper
# ----------------------------------------------------------------------------
def cvae_forward(xf, xc, eps_lanes, w_slab, b_slab):
    """xf: (B, 64), xc: (B, 8), eps_lanes: (B, 128) N(0,1) noise (only lanes
    [72, 80) are consumed)."""
    Bsz = xf.shape[0]
    vmem = pl.BlockSpec(memory_space=pltpu.MemorySpace.VMEM)

    flops = 2 * Bsz * LANES * LANES * N_LAYERS
    bytes_accessed = (xf.size * 4 + xc.size * 4 + eps_lanes.size * 4
                      + w_slab.size * 2 + b_slab.size * 4 + Bsz * LANES * 4)

    out = pl.pallas_call(
        functools.partial(cvae_kernel, hidden_dtype=HIDDEN_DTYPE),
        out_shape=jax.ShapeDtypeStruct((Bsz, LANES), jnp.float32),
        in_specs=[vmem, vmem, vmem, vmem, vmem],
        out_specs=vmem,
        scratch_shapes=[pltpu.VMEM((Bsz, LANES), jnp.float32)],
        cost_estimate=pl.CostEstimate(
            flops=flops, transcendentals=Bsz * LANES,
            bytes_accessed=bytes_accessed),
    )(xf, xc, eps_lanes, w_slab, b_slab)

    recon = out[:, :OUT_FEATURES]
    mu = out[:, MU_OFF:MU_OFF + IN_FEATURES]
    log_var = out[:, LV_OFF:LV_OFF + IN_FEATURES]
    return recon, mu, log_var


# ----------------------------------------------------------------------------
# Pure-JAX f32 reference (module semantics)
# ----------------------------------------------------------------------------
def ref_forward(xf, xc, eps, params):
    (we1, be1, we2, be2, we3, be3,
     wd1, bd1, wd2, bd2, wd3, bd3, wd4, bd4) = params
    lin = lambda x, w, b: x @ w + b
    x = jax.nn.relu(lin(xf, we1, be1))
    x = jax.nn.relu(lin(x, we2, be2))
    x = lin(x, we3, be3)
    mu = x[:, :IN_FEATURES]
    lv = x[:, IN_FEATURES:]
    z = mu + eps * jnp.exp(0.5 * lv)
    z = jnp.concatenate([z, xc], axis=1)
    x = jax.nn.relu(lin(z, wd1, bd1))
    x = jax.nn.relu(lin(x, wd2, bd2))
    x = jax.nn.relu(lin(x, wd3, bd3))
    return lin(x, wd4, bd4), mu, lv


if __name__ == "__main__":
    key = jax.random.PRNGKey(0)
    k_params, k_xf, k_xc, k_eps = jax.random.split(key, 4)

    params = make_params(k_params)
    w_slab, b_slab = pack_params(params)

    xf = jax.random.normal(k_xf, (BATCH, OUT_FEATURES), jnp.float32)
    xc = jax.random.normal(k_xc, (BATCH, IN_FEATURES), jnp.float32)
    # TODO(synk): torch.randn_like(std) inside reparameterize is replaced by
    # deterministic noise supplied by the caller, generated directly in the
    # kernel's lane layout (only lanes [72,80) are consumed).
    eps_lanes = jax.random.normal(k_eps, (BATCH, LANES), jnp.float32)

    fwd = jax.jit(cvae_forward)
    recon, mu, log_var = fwd(xf, xc, eps_lanes, w_slab, b_slab)
    jax.block_until_ready((recon, mu, log_var))

    # sanity check vs f32 reference (bf16 weights / MXU operands, plus bf16
    # hidden activations on v6e/v7x -> loosened tolerances)
    tol = 5e-2 if HIDDEN_DTYPE == jnp.bfloat16 else 3e-2
    eps_used = eps_lanes[:, LV_OFF:LV_OFF + IN_FEATURES]
    r_ref, mu_r, lv_r = ref_forward(xf, xc, eps_used, params)
    assert jnp.allclose(recon, r_ref, atol=tol, rtol=tol), \
        float(jnp.max(jnp.abs(recon - r_ref)))
    assert jnp.allclose(mu, mu_r, atol=tol, rtol=tol), \
        float(jnp.max(jnp.abs(mu - mu_r)))
    assert jnp.allclose(log_var, lv_r, atol=tol, rtol=tol), \
        float(jnp.max(jnp.abs(log_var - lv_r)))

    print("KERNEL_OK")
</pallas_src>

<mosaic_0001>
module attributes {stable_mosaic.version = 11 : i64} {
  func.func @cvae_kernel(%arg0: memref<8x64xf32, #tpu.memory_space<vmem>>, %arg1: memref<8x8xf32, #tpu.memory_space<vmem>>, %arg2: memref<8x128xf32, #tpu.memory_space<vmem>>, %arg3: memref<7x128x128xbf16, #tpu.memory_space<vmem>>, %arg4: memref<7x1x128xf32, #tpu.memory_space<vmem>>, %arg5: memref<8x128xf32, #tpu.memory_space<vmem>>, %arg6: memref<8x128xf32, #tpu.memory_space<vmem>>) attributes {dimension_semantics = [], scalar_prefetch = 0 : i64, scratch_operands = 1 : i64, tpu.core_type = #tpu.core_type<tc>} {
    %cst = arith.constant 0.000000e+00 : f32
    %0 = vector.broadcast %cst : f32 to vector<8x128xf32>
    %c0 = arith.constant 0 : index
    %c0_0 = arith.constant 0 : index
    %1 = vector.load %arg6[%c0, %c0_0] : memref<8x128xf32, #tpu.memory_space<vmem>>, vector<8x128xf32>
    tpu.vector_store %arg6[%c0, %c0_0], %0 {strides = array<i32>} : memref<8x128xf32, #tpu.memory_space<vmem>>, vector<8x128xf32>,
    %c0_1 = arith.constant 0 : index
    %c0_2 = arith.constant 0 : index
    %2 = vector.load %arg1[%c0_1, %c0_2] : memref<8x8xf32, #tpu.memory_space<vmem>>, vector<8x8xf32>
    %c0_3 = arith.constant 0 : index
    %c0_4 = arith.constant 0 : index
    %3 = vector.load %arg6[%c0_3, %c0_4] : memref<8x128xf32, #tpu.memory_space<vmem>>, vector<8x8xf32>
    tpu.vector_store %arg6[%c0_3, %c0_4], %2 {strides = array<i32>} : memref<8x128xf32, #tpu.memory_space<vmem>>, vector<8x8xf32>,
    %c0_5 = arith.constant 0 : index
    %c0_6 = arith.constant 0 : index
    %4 = vector.load %arg6[%c0_5, %c0_6] : memref<8x128xf32, #tpu.memory_space<vmem>>, vector<8x128xf32>
    %c0_7 = arith.constant 0 : index
    %c0_8 = arith.constant 0 : index
    %5 = vector.load %arg2[%c0_7, %c0_8] : memref<8x128xf32, #tpu.memory_space<vmem>>, vector<8x128xf32>
    %c0_9 = arith.constant 0 : index
    %c0_10 = arith.constant 0 : index
    %6 = vector.load %arg0[%c0_9, %c0_10] : memref<8x64xf32, #tpu.memory_space<vmem>>, vector<8x64xf32>
    %c0_11 = arith.constant 0 : index
    %c0_12 = arith.constant 0 : index
    %c0_13 = arith.constant 0 : index
    %7 = vector.load %arg3[%c0_11, %c0_12, %c0_13] : memref<7x128x128xbf16, #tpu.memory_space<vmem>>, vector<1x128x128xbf16>
    %8 = vector.shape_cast %7 : vector<1x128x128xbf16> to vector<128x128xbf16>
    %9 = vector.extract_strided_slice %8 {offsets = [0, 0], sizes = [64, 128], strides = [1, 1]} : vector<128x128xbf16> to vector<64x128xbf16>
    %c0_14 = arith.constant 0 : index
    %c0_15 = arith.constant 0 : index
    %c0_16 = arith.constant 0 : index
    %10 = vector.load %arg4[%c0_14, %c0_15, %c0_16] : memref<7x1x128xf32, #tpu.memory_space<vmem>>, vector<1x1x128xf32>
    %11 = vector.shape_cast %10 : vector<1x1x128xf32> to vector<1x128xf32>
    %12 = arith.truncf %6 : vector<8x64xf32> to vector<8x64xbf16>
    %cst_17 = arith.constant dense<0.000000e+00> : vector<8x128xf32>
    %13 = tpu.matmul %12, %9, %cst_17 {dimension_numbers = #tpu.dot_dimension_numbers<[1], [0], [0], [1], [0, 0, 1, 1], [], []>} : vector<8x64xbf16>, vector<64x128xbf16>, vector<8x128xf32> -> vector<8x128xf32>
    %14 = vector.broadcast %11 : vector<1x128xf32> to vector<8x128xf32>
    %15 = arith.addf %13, %14 : vector<8x128xf32>
    %cst_18 = arith.constant 0.000000e+00 : f32
    %16 = vector.broadcast %cst_18 : f32 to vector<8x128xf32>
    %17 = arith.maximumf %15, %16 : vector<8x128xf32>
    %c1 = arith.constant 1 : index
    %c0_19 = arith.constant 0 : index
    %c0_20 = arith.constant 0 : index
    %18 = vector.load %arg3[%c1, %c0_19, %c0_20] : memref<7x128x128xbf16, #tpu.memory_space<vmem>>, vector<1x128x128xbf16>
    %19 = vector.shape_cast %18 : vector<1x128x128xbf16> to vector<128x128xbf16>
    %c1_21 = arith.constant 1 : index
    %c0_22 = arith.constant 0 : index
    %c0_23 = arith.constant 0 : index
    %20 = vector.load %arg4[%c1_21, %c0_22, %c0_23] : memref<7x1x128xf32, #tpu.memory_space<vmem>>, vector<1x1x128xf32>
    %21 = vector.shape_cast %20 : vector<1x1x128xf32> to vector<1x128xf32>
    %22 = arith.truncf %17 : vector<8x128xf32> to vector<8x128xbf16>
    %cst_24 = arith.constant dense<0.000000e+00> : vector<8x128xf32>
    %23 = tpu.matmul %22, %19, %cst_24 {dimension_numbers = #tpu.dot_dimension_numbers<[1], [0], [0], [1], [0, 0, 1, 1], [], []>} : vector<8x128xbf16>, vector<128x128xbf16>, vector<8x128xf32> -> vector<8x128xf32>
    %24 = vector.broadcast %21 : vector<1x128xf32> to vector<8x128xf32>
    %25 = arith.addf %23, %24 : vector<8x128xf32>
    %cst_25 = arith.constant 0.000000e+00 : f32
    %26 = vector.broadcast %cst_25 : f32 to vector<8x128xf32>
    %27 = arith.maximumf %25, %26 : vector<8x128xf32>
    %c2 = arith.constant 2 : index
    %c0_26 = arith.constant 0 : index
    %c0_27 = arith.constant 0 : index
    %28 = vector.load %arg3[%c2, %c0_26, %c0_27] : memref<7x128x128xbf16, #tpu.memory_space<vmem>>, vector<1x128x128xbf16>
    %29 = vector.shape_cast %28 : vector<1x128x128xbf16> to vector<128x128xbf16>
    %c2_28 = arith.constant 2 : index
    %c0_29 = arith.constant 0 : index
    %c0_30 = arith.constant 0 : index
    %30 = vector.load %arg4[%c2_28, %c0_29, %c0_30] : memref<7x1x128xf32, #tpu.memory_space<vmem>>, vector<1x1x128xf32>
    %31 = vector.shape_cast %30 : vector<1x1x128xf32> to vector<1x128xf32>
    %32 = arith.truncf %27 : vector<8x128xf32> to vector<8x128xbf16>
    %cst_31 = arith.constant dense<0.000000e+00> : vector<8x128xf32>
    %33 = tpu.matmul %32, %29, %cst_31 {dimension_numbers = #tpu.dot_dimension_numbers<[1], [0], [0], [1], [0, 0, 1, 1], [], []>} : vector<8x128xbf16>, vector<128x128xbf16>, vector<8x128xf32> -> vector<8x128xf32>
    %34 = vector.broadcast %31 : vector<1x128xf32> to vector<8x128xf32>
    %35 = arith.addf %33, %34 : vector<8x128xf32>
    %36 = tpu.iota {dimensions = array<i32: 1>} : vector<8x128xi32>
    %c72_i32 = arith.constant 72 : i32
    %37 = vector.broadcast %c72_i32 : i32 to vector<8x128xi32>
    %38 = arith.cmpi sge, %36, %37 : vector<8x128xi32>
    %c80_i32 = arith.constant 80 : i32
    %39 = vector.broadcast %c80_i32 : i32 to vector<8x128xi32>
    %40 = arith.cmpi slt, %36, %39 : vector<8x128xi32>
    %41 = arith.andi %38, %40 : vector<8x128xi1>
    %cst_32 = arith.constant 0.000000e+00 : f32
    %42 = vector.broadcast %cst_32 : f32 to vector<8x128xf32>
    %43 = arith.select %41, %35, %42 : vector<8x128xi1>, vector<8x128xf32>
    %cst_33 = arith.constant 5.000000e-01 : f32
    %44 = vector.broadcast %cst_33 : f32 to vector<8x128xf32>
    %45 = arith.mulf %44, %43 : vector<8x128xf32>
    %46 = math.exp %45 : vector<8x128xf32>
    %47 = arith.mulf %5, %46 : vector<8x128xf32>
    %48 = arith.select %41, %47, %35 : vector<8x128xi1>, vector<8x128xf32>
    %49 = arith.addf %48, %4 : vector<8x128xf32>
    %c3 = arith.constant 3 : index
    %c0_34 = arith.constant 0 : index
    %c0_35 = arith.constant 0 : index
    %50 = vector.load %arg3[%c3, %c0_34, %c0_35] : memref<7x128x128xbf16, #tpu.memory_space<vmem>>, vector<1x128x128xbf16>
    %51 = vector.shape_cast %50 : vector<1x128x128xbf16> to vector<128x128xbf16>
    %c3_36 = arith.constant 3 : index
    %c0_37 = arith.constant 0 : index
    %c0_38 = arith.constant 0 : index
    %52 = vector.load %arg4[%c3_36, %c0_37, %c0_38] : memref<7x1x128xf32, #tpu.memory_space<vmem>>, vector<1x1x128xf32>
    %53 = vector.shape_cast %52 : vector<1x1x128xf32> to vector<1x128xf32>
    %54 = arith.truncf %49 : vector<8x128xf32> to vector<8x128xbf16>
    %cst_39 = arith.constant dense<0.000000e+00> : vector<8x128xf32>
    %55 = tpu.matmul %54, %51, %cst_39 {dimension_numbers = #tpu.dot_dimension_numbers<[1], [0], [0], [1], [0, 0, 1, 1], [], []>} : vector<8x128xbf16>, vector<128x128xbf16>, vector<8x128xf32> -> vector<8x128xf32>
    %56 = vector.broadcast %53 : vector<1x128xf32> to vector<8x128xf32>
    %57 = arith.addf %55, %56 : vector<8x128xf32>
    %cst_40 = arith.constant 0.000000e+00 : f32
    %58 = vector.broadcast %cst_40 : f32 to vector<8x128xf32>
    %59 = arith.maximumf %57, %58 : vector<8x128xf32>
    %c4 = arith.constant 4 : index
    %c0_41 = arith.constant 0 : index
    %c0_42 = arith.constant 0 : index
    %60 = vector.load %arg3[%c4, %c0_41, %c0_42] : memref<7x128x128xbf16, #tpu.memory_space<vmem>>, vector<1x128x128xbf16>
    %61 = vector.shape_cast %60 : vector<1x128x128xbf16> to vector<128x128xbf16>
    %c4_43 = arith.constant 4 : index
    %c0_44 = arith.constant 0 : index
    %c0_45 = arith.constant 0 : index
    %62 = vector.load %arg4[%c4_43, %c0_44, %c0_45] : memref<7x1x128xf32, #tpu.memory_space<vmem>>, vector<1x1x128xf32>
    %63 = vector.shape_cast %62 : vector<1x1x128xf32> to vector<1x128xf32>
    %64 = arith.truncf %59 : vector<8x128xf32> to vector<8x128xbf16>
    %cst_46 = arith.constant dense<0.000000e+00> : vector<8x128xf32>
    %65 = tpu.matmul %64, %61, %cst_46 {dimension_numbers = #tpu.dot_dimension_numbers<[1], [0], [0], [1], [0, 0, 1, 1], [], []>} : vector<8x128xbf16>, vector<128x128xbf16>, vector<8x128xf32> -> vector<8x128xf32>
    %66 = vector.broadcast %63 : vector<1x128xf32> to vector<8x128xf32>
    %67 = arith.addf %65, %66 : vector<8x128xf32>
    %cst_47 = arith.constant 0.000000e+00 : f32
    %68 = vector.broadcast %cst_47 : f32 to vector<8x128xf32>
    %69 = arith.maximumf %67, %68 : vector<8x128xf32>
    %c5 = arith.constant 5 : index
    %c0_48 = arith.constant 0 : index
    %c0_49 = arith.constant 0 : index
    %70 = vector.load %arg3[%c5, %c0_48, %c0_49] : memref<7x128x128xbf16, #tpu.memory_space<vmem>>, vector<1x128x128xbf16>
    %71 = vector.shape_cast %70 : vector<1x128x128xbf16> to vector<128x128xbf16>
    %c5_50 = arith.constant 5 : index
    %c0_51 = arith.constant 0 : index
    %c0_52 = arith.constant 0 : index
    %72 = vector.load %arg4[%c5_50, %c0_51, %c0_52] : memref<7x1x128xf32, #tpu.memory_space<vmem>>, vector<1x1x128xf32>
    %73 = vector.shape_cast %72 : vector<1x1x128xf32> to vector<1x128xf32>
    %74 = arith.truncf %69 : vector<8x128xf32> to vector<8x128xbf16>
    %cst_53 = arith.constant dense<0.000000e+00> : vector<8x128xf32>
    %75 = tpu.matmul %74, %71, %cst_53 {dimension_numbers = #tpu.dot_dimension_numbers<[1], [0], [0], [1], [0, 0, 1, 1], [], []>} : vector<8x128xbf16>, vector<128x128xbf16>, vector<8x128xf32> -> vector<8x128xf32>
    %76 = vector.broadcast %73 : vector<1x128xf32> to vector<8x128xf32>
    %77 = arith.addf %75, %76 : vector<8x128xf32>
    %cst_54 = arith.constant 0.000000e+00 : f32
    %78 = vector.broadcast %cst_54 : f32 to vector<8x128xf32>
    %79 = arith.maximumf %77, %78 : vector<8x128xf32>
    %c6 = arith.constant 6 : index
    %c0_55 = arith.constant 0 : index
    %c0_56 = arith.constant 0 : index
    %80 = vector.load %arg3[%c6, %c0_55, %c0_56] : memref<7x128x128xbf16, #tpu.memory_space<vmem>>, vector<1x128x128xbf16>
    %81 = vector.shape_cast %80 : vector<1x128x128xbf16> to vector<128x128xbf16>
    %c6_57 = arith.constant 6 : index
    %c0_58 = arith.constant 0 : index
    %c0_59 = arith.constant 0 : index
    %82 = vector.load %arg4[%c6_57, %c0_58, %c0_59] : memref<7x1x128xf32, #tpu.memory_space<vmem>>, vector<1x1x128xf32>
    %83 = vector.shape_cast %82 : vector<1x1x128xf32> to vector<1x128xf32>
    %84 = arith.truncf %79 : vector<8x128xf32> to vector<8x128xbf16>
    %cst_60 = arith.constant dense<0.000000e+00> : vector<8x128xf32>
    %85 = tpu.matmul %84, %81, %cst_60 {dimension_numbers = #tpu.dot_dimension_numbers<[1], [0], [0], [1], [0, 0, 1, 1], [], []>} : vector<8x128xbf16>, vector<128x128xbf16>, vector<8x128xf32> -> vector<8x128xf32>
    %86 = vector.broadcast %83 : vector<1x128xf32> to vector<8x128xf32>
    %87 = arith.addf %85, %86 : vector<8x128xf32>
    %88 = arith.addf %87, %35 : vector<8x128xf32>
    %c0_61 = arith.constant 0 : index
    %c0_62 = arith.constant 0 : index
    %89 = vector.load %arg5[%c0_61, %c0_62] : memref<8x128xf32, #tpu.memory_space<vmem>>, vector<8x128xf32>
    tpu.vector_store %arg5[%c0_61, %c0_62], %88 {strides = array<i32>} : memref<8x128xf32, #tpu.memory_space<vmem>>, vector<8x128xf32>,
    return
  }
}

</mosaic_0001>

<llo_original>
// kernel: cvae_forward.1
$region0: #{cvae_forward.1}
  #allocation0 [shape = 'u32[]', space=smem, size = 0x4, offset = 0x4, fixed_abs, tag = 'smem constant byte address 0x4 - core index']
  #allocation1 [shape = 'u32[144,128]{1,0:T(1,128)}', space=vmem, size = 0x12000, scoped, tag = 'internal scratch']
  #allocation2 [shape = 'f32[8,128]{1,0:T(8,128)}', space=vmem, size = 0x1000, scoped, tag = 'scratch operand']
  %s0 = inlined_call_operand.hbm [shape: f32[8,64], index: 0, kind: input, shape index: {}]
  %s1 = inlined_call_operand.hbm [shape: f32[8,8], index: 1, kind: input, shape index: {}]
  %s2 = inlined_call_operand.hbm [shape: f32[8,128], index: 2, kind: input, shape index: {}]
  %s3 = inlined_call_operand.hbm [shape: bf16[7,128,128], index: 3, kind: input, shape index: {}]
  %s4 = inlined_call_operand.vmem [shape: f32[7,1,128], index: 4, kind: input, shape index: {}]
  %s5 = inlined_call_operand.vmem [shape: f32[8,128], index: 5, kind: output, shape index: {}]
  %s6 = sld [smem:[#allocation0]]
  $region46: #{cvae_forward.1} parent=0
    _
  %s8 = ssub.s32 1, %s6
  %s9 = scalar_select 0, %s8, %s6
  $region1: #{cvae_forward.1} parent=0
    #allocation3 [shape = 'u8[4096]{0}', space=vmem, size = 0x1000, scoped, tag = 'input window, operand 0, single buffered']
    #allocation4 [shape = 's32[1]{0}', space=sflag, size = 0x4, scoped, tag = 'scoped memory for cvae_forward.1']
    #allocation5 [shape = 'u8[4096]{0}', space=vmem, size = 0x1000, scoped, tag = 'input window, operand 1, single buffered']
    #allocation6 [shape = 's32[1]{0}', space=sflag, size = 0x4, scoped, tag = 'scoped memory for cvae_forward.1']
    #allocation7 [shape = 'u8[4096]{0}', space=vmem, size = 0x1000, scoped, tag = 'input window, operand 2, single buffered']
    #allocation8 [shape = 'u8[229376]{0}', space=vmem, size = 0x38000, scoped, tag = 'input window, operand 3, single buffered']
    #allocation9 [shape = 's32[1]{0}', space=sflag, size = 0x4, scoped, tag = 'scoped memory for cvae_forward.1']
    %10 = vsyncpa [#allocation4], 0
    %11 = vsyncpa [#allocation6], 0
    %12 = vsyncpa [#allocation9], 0
    // Predicated region
    $region2: #{cvae_forward.1} parent=1 // pred_check
      _
    $region3: #{cvae_forward.1} parent=1 // pred_check_branch
      %14 = sbr.rel (0) target = $region5
    $region4: #{cvae_forward.1} parent=1 // pred_region
      %s16 = ssub.s32 128, 128
      %17 = vsyncadd [#allocation4], %s16
      %s19 = sshll.u32 [#allocation3], 4
      %s20 = int_to_ptr.vmem [resolvable:$true] %s19
      %22 = dma.hbm_to_vmem [thread:$0]  %s0, 128, %s20, [#allocation4]
    $region5: #{cvae_forward.1} parent=1 // pred_fallthru
      _
    // Predicated region
    $region6: #{cvae_forward.1} parent=1 // pred_check
      _
    $region7: #{cvae_forward.1} parent=1 // pred_check_branch
      %24 = sbr.rel (0) target = $region9
    $region8: #{cvae_forward.1} parent=1 // pred_region
      %s26 = ssub.s32 128, 128
      %27 = vsyncadd [#allocation6], %s26
      %s29 = sshll.u32 [#allocation5], 4
      %s30 = int_to_ptr.vmem [resolvable:$true] %s29
      %32 = dma.hbm_to_vmem [thread:$0]  %s1, 128, %s30, [#allocation6]
    $region9: #{cvae_forward.1} parent=1 // pred_fallthru
      _
    // Predicated region
    $region10: #{cvae_forward.1} parent=1 // pred_check
      _
    $region11: #{cvae_forward.1} parent=1 // pred_check_branch
      %34 = sbr.rel (0) target = $region13
    $region12: #{cvae_forward.1} parent=1 // pred_region
      %s36 = ssub.s32 128, 128
      %37 = vsyncadd [#allocation6], %s36
      %s39 = sshll.u32 [#allocation7], 4
      %s40 = int_to_ptr.vmem [resolvable:$true] %s39
      %42 = dma.hbm_to_vmem [thread:$0]  %s2, 128, %s40, [#allocation6]
    $region13: #{cvae_forward.1} parent=1 // pred_fallthru
      _
    // Predicated region
    $region14: #{cvae_forward.1} parent=1 // pred_check
      _
    $region15: #{cvae_forward.1} parent=1 // pred_check_branch
      %44 = sbr.rel (0) target = $region17
    $region16: #{cvae_forward.1} parent=1 // pred_region
      %s46 = ssub.s32 7168, 7168
      %47 = vsyncadd [#allocation9], %s46
      %s48 = sshll.u32 [#allocation8], 4
      %s49 = int_to_ptr.vmem [resolvable:$true] %s48
      %54 = dma.hbm_to_vmem [thread:$0]  %s3, 7168, %s49, [#allocation9], 64, 64, 4
    $region17: #{cvae_forward.1} parent=1 // pred_fallthru
      _
    // Predicated region
    $region18: #{cvae_forward.1} parent=1 // pred_check
      _
    $region19: #{cvae_forward.1} parent=1 // pred_check_branch
      %56 = sbr.rel (0) target = $region21
    $region20: #{cvae_forward.1} parent=1 // pred_region
      _
    $region21: #{cvae_forward.1} parent=1 // pred_fallthru
      _
    // Predicated region
    $region22: #{cvae_forward.1} parent=1 // pred_check
      _
    $region23: #{cvae_forward.1} parent=1 // pred_check_branch
      %58 = sbr.rel (0) target = $region25
    $region24: #{cvae_forward.1} parent=1 // pred_region
      %59 = dma.done [#allocation4], 128
    $region25: #{cvae_forward.1} parent=1 // pred_fallthru
      _
    // Predicated region
    $region26: #{cvae_forward.1} parent=1 // pred_check
      _
    $region27: #{cvae_forward.1} parent=1 // pred_check_branch
      %61 = sbr.rel (0) target = $region29
    $region28: #{cvae_forward.1} parent=1 // pred_region
      %62 = dma.done [#allocation6], 128
    $region29: #{cvae_forward.1} parent=1 // pred_fallthru
      _
    // Predicated region
    $region30: #{cvae_forward.1} parent=1 // pred_check
      _
    $region31: #{cvae_forward.1} parent=1 // pred_check_branch
      %64 = sbr.rel (0) target = $region33
    $region32: #{cvae_forward.1} parent=1 // pred_region
      %65 = dma.done [#allocation6], 128
    $region33: #{cvae_forward.1} parent=1 // pred_fallthru
      _
    // Predicated region
    $region34: #{cvae_forward.1} parent=1 // pred_check
      _
    $region35: #{cvae_forward.1} parent=1 // pred_check_branch
      %67 = sbr.rel (0) target = $region37
    $region36: #{cvae_forward.1} parent=1 // pred_region
      %68 = dma.done [#allocation9], 7168
    $region37: #{cvae_forward.1} parent=1 // pred_fallthru
      _
    %70 = vst [vmem:[#allocation2] sm:$0xff] 0.0
    %v71 = vld [vmem:[#allocation5] sm:$0xff]
    %vm72 = vcmask 64512
    %73 = vst.msk [vmem:[#allocation2] sm:$0xff] %vm72, %v71
    %v74 = vld [vmem:[#allocation2] sm:$0xff]
    %v75 = vld [vmem:[#allocation7] sm:$0xff]
    %v76 = vld [vmem:[#allocation3] sm:$0xff]
    %v77 = vld [vmem:[#allocation8] sm:$0xf]
    %v78 = vld [vmem:[#allocation8 + $0x4] sm:$0xf]
    %v79 = vld [vmem:[#allocation8 + $0x8] sm:$0xf]
    %v80 = vld [vmem:[#allocation8 + $0xc] sm:$0xf]
    %v81 = vld [vmem:[#allocation8 + $0x10] sm:$0xf]
    %v82 = vld [vmem:[#allocation8 + $0x14] sm:$0xf]
    %v83 = vld [vmem:[#allocation8 + $0x18] sm:$0xf]
    %v84 = vld [vmem:[#allocation8 + $0x1c] sm:$0xf]
    %v85 = vld [vmem:[%s4] sm:$0x1]
    %v86 = vpack.c.bf16 %v76, %v76
    %v88 = vlaneseq
    %v89 = vshrl.u32 %v88, 7
    %v90 = vsub.s32 0, %v89
    %v91 = vrot.slane %v85, %v90
    %v101 = vunpack.c.l.b16 %v77
    %v102 = vunpack.c.l.b16 %v78
    %v103 = vunpack.c.l.b16 %v79
    %v104 = vunpack.c.l.b16 %v80
    %v105 = vunpack.c.l.b16 %v81
    %v106 = vunpack.c.l.b16 %v82
    %v107 = vunpack.c.l.b16 %v83
    %v108 = vunpack.c.l.b16 %v84
    %v109 = vpack.c.b16 %v102, %v101
    %v110 = vpack.c.b16 %v104, %v103
    %v111 = vpack.c.b16 %v106, %v105
    %v112 = vpack.c.b16 %v108, %v107
    %vm117 = vcmask 523264
    %v119 = vsel %vm117, %v86, 0
    %121 = vmatprep.subr.bf16.mxu0 0
    %122 = vmatpush1.bf16.msra.mxu0 %v109
    %123 = vmatprep.subr.bf16.mxu0 0
    %124 = vmatpush1.bf16.msra.mxu0 %v110
    %125 = vmatprep.subr.bf16.mxu0 0
    %126 = vmatpush1.bf16.msra.mxu0 %v111
    %127 = vmatprep.subr.bf16.mxu0 0
    %128 = vmatpush1.bf16.msra.mxu0 %v112
    %129 = vmatprep.subr.bf16.mxu0 0
    %130 = vmatpush1.bf16.msra.mxu0 0
    %131 = vmatprep.subr.bf16.mxu0 0
    %132 = vmatpush1.bf16.msra.mxu0 0
    %133 = vmatprep.subr.bf16.mxu0 0
    %134 = vmatpush1.bf16.msra.mxu0 0
    %135 = vmatprep.subr.bf16.mxu0 0
    %136 = vmatpush1.bf16.msra.mxu0 0
    %137 = vmatprep.subr.bf16.mxu0 0
    %138 = vmatpush1.bf16.msra.mxu0 0
    %139 = vmatprep.subr.bf16.mxu0 0
    %140 = vmatpush1.bf16.msra.mxu0 0
    %141 = vmatprep.subr.bf16.mxu0 0
    %142 = vmatpush1.bf16.msra.mxu0 0
    %143 = vmatprep.subr.bf16.mxu0 0
    %144 = vmatpush1.bf16.msra.mxu0 0
    %145 = vmatprep.subr.bf16.mxu0 0
    %146 = vmatpush1.bf16.msra.mxu0 0
    %147 = vmatprep.subr.bf16.mxu0 0
    %148 = vmatpush1.bf16.msra.mxu0 0
    %149 = vmatprep.subr.bf16.mxu0 0
    %150 = vmatpush1.bf16.msra.mxu0 0
    %151 = vmatprep.subr.bf16.mxu0 0
    %152 = vmatpush1.bf16.msra.mxu0 0
    %153 = vmatprep.mubr.bf16.mxu0 0
    %154 = vmatmul.mubr.bf16.gmra.mrb[0].mxu0 %v119
    %v155 = vpop.f32.mrb[0].mxu0
    %v156 = vadd.f32 %v91, %v155
    %v157 = vpop.f32.mrb[0].mxu0
    %v158 = vpop.f32.mrb[0].mxu0
    %v159 = vpop.f32.mrb[0].mxu0
    %160 = vdwg.mxu0
    %v161 = vmax.f32 %v156, 0.0
    %s162 = scalar_lea.vmem [#allocation8], 64
    %v163 = vld [vmem:[%s162] sm:$0xf]
    %v164 = vld [vmem:[%s162 + $0x4] sm:$0xf]
    %v165 = vld [vmem:[%s162 + $0x8] sm:$0xf]
    %v166 = vld [vmem:[%s162 + $0xc] sm:$0xf]
    %v167 = vld [vmem:[%s162 + $0x10] sm:$0xf]
    %v168 = vld [vmem:[%s162 + $0x14] sm:$0xf]
    %v169 = vld [vmem:[%s162 + $0x18] sm:$0xf]
    %v170 = vld [vmem:[%s162 + $0x1c] sm:$0xf]
    %v171 = vld [vmem:[%s162 + $0x20] sm:$0xf]
    %v172 = vld [vmem:[%s162 + $0x24] sm:$0xf]
    %v173 = vld [vmem:[%s162 + $0x28] sm:$0xf]
    %v174 = vld [vmem:[%s162 + $0x2c] sm:$0xf]
    %v175 = vld [vmem:[%s162 + $0x30] sm:$0xf]
    %v176 = vld [vmem:[%s162 + $0x34] sm:$0xf]
    %v177 = vld [vmem:[%s162 + $0x38] sm:$0xf]
    %v178 = vld [vmem:[%s162 + $0x3c] sm:$0xf]
    %s179 = scalar_lea.vmem %s4, 1
    %v180 = vld [vmem:[%s179] sm:$0x1]
    %v181 = vpack.c.bf16 %v161, %v161
    %v183 = vlaneseq
    %v184 = vshrl.u32 %v183, 7
    %v185 = vsub.s32 0, %v184
    %v186 = vrot.slane %v180, %v185
    %v204 = vunpack.c.l.b16 %v163
    %v205 = vunpack.c.l.b16 %v164
    %v206 = vunpack.c.l.b16 %v165
    %v207 = vunpack.c.l.b16 %v166
    %v208 = vunpack.c.l.b16 %v167
    %v209 = vunpack.c.l.b16 %v168
    %v210 = vunpack.c.l.b16 %v169
    %v211 = vunpack.c.l.b16 %v170
    %v212 = vunpack.c.l.b16 %v171
    %v213 = vunpack.c.l.b16 %v172
    %v214 = vunpack.c.l.b16 %v173
    %v215 = vunpack.c.l.b16 %v174
    %v216 = vunpack.c.l.b16 %v175
    %v217 = vunpack.c.l.b16 %v176
    %v218 = vunpack.c.l.b16 %v177
    %v219 = vunpack.c.l.b16 %v178
    %v220 = vpack.c.b16 %v205, %v204
    %v221 = vpack.c.b16 %v207, %v206
    %v222 = vpack.c.b16 %v209, %v208
    %v223 = vpack.c.b16 %v211, %v210
    %v224 = vpack.c.b16 %v213, %v212
    %v225 = vpack.c.b16 %v215, %v214
    %v226 = vpack.c.b16 %v217, %v216
    %v227 = vpack.c.b16 %v219, %v218
    %236 = vmatprep.subr.bf16.mxu0 0
    %237 = vmatpush1.bf16.msra.mxu0 %v220
    %238 = vmatprep.subr.bf16.mxu0 0
    %239 = vmatpush1.bf16.msra.mxu0 %v221
    %240 = vmatprep.subr.bf16.mxu0 0
    %241 = vmatpush1.bf16.msra.mxu0 %v222
    %242 = vmatprep.subr.bf16.mxu0 0
    %243 = vmatpush1.bf16.msra.mxu0 %v223
    %244 = vmatprep.subr.bf16.mxu0 0
    %245 = vmatpush1.bf16.msra.mxu0 %v224
    %246 = vmatprep.subr.bf16.mxu0 0
    %247 = vmatpush1.bf16.msra.mxu0 %v225
    %248 = vmatprep.subr.bf16.mxu0 0
    %249 = vmatpush1.bf16.msra.mxu0 %v226
    %250 = vmatprep.subr.bf16.mxu0 0
    %251 = vmatpush1.bf16.msra.mxu0 %v227
    %252 = vmatprep.subr.bf16.mxu0 0
    %253 = vmatpush1.bf16.msra.mxu0 0
    %254 = vmatprep.subr.bf16.mxu0 0
    %255 = vmatpush1.bf16.msra.mxu0 0
    %256 = vmatprep.subr.bf16.mxu0 0
    %257 = vmatpush1.bf16.msra.mxu0 0
    %258 = vmatprep.subr.bf16.mxu0 0
    %259 = vmatpush1.bf16.msra.mxu0 0
    %260 = vmatprep.subr.bf16.mxu0 0
    %261 = vmatpush1.bf16.msra.mxu0 0
    %262 = vmatprep.subr.bf16.mxu0 0
    %263 = vmatpush1.bf16.msra.mxu0 0
    %264 = vmatprep.subr.bf16.mxu0 0
    %265 = vmatpush1.bf16.msra.mxu0 0
    %266 = vmatprep.subr.bf16.mxu0 0
    %267 = vmatpush1.bf16.msra.mxu0 0
    %268 = vmatprep.mubr.bf16.mxu0 0
    %269 = vmatmul.mubr.bf16.gmra.mrb[0].mxu0 %v181
    %v270 = vpop.f32.mrb[0].mxu0
    %v271 = vadd.f32 %v186, %v270
    %v272 = vpop.f32.mrb[0].mxu0
    %v273 = vpop.f32.mrb[0].mxu0
    %v274 = vpop.f32.mrb[0].mxu0
    %275 = vdwg.mxu0
    %v276 = vmax.f32 %v271, 0.0
    %s277 = scalar_lea.vmem [#allocation8], 128
    %v278 = vld [vmem:[%s277] sm:$0xf]
    %v279 = vld [vmem:[%s277 + $0x4] sm:$0xf]
    %v280 = vld [vmem:[%s277 + $0x8] sm:$0xf]
    %v281 = vld [vmem:[%s277 + $0xc] sm:$0xf]
    %v282 = vld [vmem:[%s277 + $0x10] sm:$0xf]
    %v283 = vld [vmem:[%s277 + $0x14] sm:$0xf]
    %v284 = vld [vmem:[%s277 + $0x18] sm:$0xf]
    %v285 = vld [vmem:[%s277 + $0x1c] sm:$0xf]
    %v286 = vld [vmem:[%s277 + $0x20] sm:$0xf]
    %v287 = vld [vmem:[%s277 + $0x24] sm:$0xf]
    %v288 = vld [vmem:[%s277 + $0x28] sm:$0xf]
    %v289 = vld [vmem:[%s277 + $0x2c] sm:$0xf]
    %v290 = vld [vmem:[%s277 + $0x30] sm:$0xf]
    %v291 = vld [vmem:[%s277 + $0x34] sm:$0xf]
    %v292 = vld [vmem:[%s277 + $0x38] sm:$0xf]
    %v293 = vld [vmem:[%s277 + $0x3c] sm:$0xf]
    %s294 = scalar_lea.vmem %s4, 2
    %v295 = vld [vmem:[%s294] sm:$0x1]
    %v296 = vpack.c.bf16 %v276, %v276
    %v298 = vlaneseq
    %v299 = vshrl.u32 %v298, 7
    %v300 = vsub.s32 0, %v299
    %v301 = vrot.slane %v295, %v300
    %v319 = vunpack.c.l.b16 %v278
    %v320 = vunpack.c.l.b16 %v279
    %v321 = vunpack.c.l.b16 %v280
    %v322 = vunpack.c.l.b16 %v281
    %v323 = vunpack.c.l.b16 %v282
    %v324 = vunpack.c.l.b16 %v283
    %v325 = vunpack.c.l.b16 %v284
    %v326 = vunpack.c.l.b16 %v285
    %v327 = vunpack.c.l.b16 %v286
    %v328 = vunpack.c.l.b16 %v287
    %v329 = vunpack.c.l.b16 %v288
    %v330 = vunpack.c.l.b16 %v289
    %v331 = vunpack.c.l.b16 %v290
    %v332 = vunpack.c.l.b16 %v291
    %v333 = vunpack.c.l.b16 %v292
    %v334 = vunpack.c.l.b16 %v293
    %v335 = vpack.c.b16 %v320, %v319
    %v336 = vpack.c.b16 %v322, %v321
    %v337 = vpack.c.b16 %v324, %v323
    %v338 = vpack.c.b16 %v326, %v325
    %v339 = vpack.c.b16 %v328, %v327
    %v340 = vpack.c.b16 %v330, %v329
    %v341 = vpack.c.b16 %v332, %v331
    %v342 = vpack.c.b16 %v334, %v333
    %351 = vmatprep.subr.bf16.mxu0 0
    %352 = vmatpush1.bf16.msra.mxu0 %v335
    %353 = vmatprep.subr.bf16.mxu0 0
    %354 = vmatpush1.bf16.msra.mxu0 %v336
    %355 = vmatprep.subr.bf16.mxu0 0
    %356 = vmatpush1.bf16.msra.mxu0 %v337
    %357 = vmatprep.subr.bf16.mxu0 0
    %358 = vmatpush1.bf16.msra.mxu0 %v338
    %359 = vmatprep.subr.bf16.mxu0 0
    %360 = vmatpush1.bf16.msra.mxu0 %v339
    %361 = vmatprep.subr.bf16.mxu0 0
    %362 = vmatpush1.bf16.msra.mxu0 %v340
    %363 = vmatprep.subr.bf16.mxu0 0
    %364 = vmatpush1.bf16.msra.mxu0 %v341
    %365 = vmatprep.subr.bf16.mxu0 0
    %366 = vmatpush1.bf16.msra.mxu0 %v342
    %367 = vmatprep.subr.bf16.mxu0 0
    %368 = vmatpush1.bf16.msra.mxu0 0
    %369 = vmatprep.subr.bf16.mxu0 0
    %370 = vmatpush1.bf16.msra.mxu0 0
    %371 = vmatprep.subr.bf16.mxu0 0
    %372 = vmatpush1.bf16.msra.mxu0 0
    %373 = vmatprep.subr.bf16.mxu0 0
    %374 = vmatpush1.bf16.msra.mxu0 0
    %375 = vmatprep.subr.bf16.mxu0 0
    %376 = vmatpush1.bf16.msra.mxu0 0
    %377 = vmatprep.subr.bf16.mxu0 0
    %378 = vmatpush1.bf16.msra.mxu0 0
    %379 = vmatprep.subr.bf16.mxu0 0
    %380 = vmatpush1.bf16.msra.mxu0 0
    %381 = vmatprep.subr.bf16.mxu0 0
    %382 = vmatpush1.bf16.msra.mxu0 0
    %383 = vmatprep.mubr.bf16.mxu0 0
    %384 = vmatmul.mubr.bf16.gmra.mrb[0].mxu0 %v296
    %v385 = vpop.f32.mrb[0].mxu0
    %v386 = vadd.f32 %v301, %v385
    %v387 = vpop.f32.mrb[0].mxu0
    %v388 = vpop.f32.mrb[0].mxu0
    %v389 = vpop.f32.mrb[0].mxu0
    %390 = vdwg.mxu0
    %v391 = vlaneseq
    %v392 = vand.u32 %v391, 127
    %vm393 = vcmp.ge.s32.totalorder %v392, 72
    %vm394 = vcmp.lt.s32.totalorder %v392, 80
    %vm395 = vmand %vm393, %vm394
    %v396 = vsel %vm395, %v386, 0.0
    %v397 = vmul.f32 %v396, 0.5
    %v398 = vmul.f32 %v397, 1.442695
    %v399 = vpow.pop %v398
    %v400 = vmul.f32 %v75, %v399
    %v401 = vsel %vm395, %v400, %v386
    %v402 = vadd.f32 %v401, %v74
    %s403 = scalar_lea.vmem [#allocation8], 192
    %v404 = vld [vmem:[%s403] sm:$0xf]
    %v405 = vld [vmem:[%s403 + $0x4] sm:$0xf]
    %v406 = vld [vmem:[%s403 + $0x8] sm:$0xf]
    %v407 = vld [vmem:[%s403 + $0xc] sm:$0xf]
    %v408 = vld [vmem:[%s403 + $0x10] sm:$0xf]
    %v409 = vld [vmem:[%s403 + $0x14] sm:$0xf]
    %v410 = vld [vmem:[%s403 + $0x18] sm:$0xf]
    %v411 = vld [vmem:[%s403 + $0x1c] sm:$0xf]
    %v412 = vld [vmem:[%s403 + $0x20] sm:$0xf]
    %v413 = vld [vmem:[%s403 + $0x24] sm:$0xf]
    %v414 = vld [vmem:[%s403 + $0x28] sm:$0xf]
    %v415 = vld [vmem:[%s403 + $0x2c] sm:$0xf]
    %v416 = vld [vmem:[%s403 + $0x30] sm:$0xf]
    %v417 = vld [vmem:[%s403 + $0x34] sm:$0xf]
    %v418 = vld [vmem:[%s403 + $0x38] sm:$0xf]
    %v419 = vld [vmem:[%s403 + $0x3c] sm:$0xf]
    %s420 = scalar_lea.vmem %s4, 3
    %v421 = vld [vmem:[%s420] sm:$0x1]
    %v422 = vpack.c.bf16 %v402, %v402
    %v424 = vlaneseq
    %v425 = vshrl.u32 %v424, 7
    %v426 = vsub.s32 0, %v425
    %v427 = vrot.slane %v421, %v426
    %v445 = vunpack.c.l.b16 %v404
    %v446 = vunpack.c.l.b16 %v405
    %v447 = vunpack.c.l.b16 %v406
    %v448 = vunpack.c.l.b16 %v407
    %v449 = vunpack.c.l.b16 %v408
    %v450 = vunpack.c.l.b16 %v409
    %v451 = vunpack.c.l.b16 %v410
    %v452 = vunpack.c.l.b16 %v411
    %v453 = vunpack.c.l.b16 %v412
    %v454 = vunpack.c.l.b16 %v413
    %v455 = vunpack.c.l.b16 %v414
    %v456 = vunpack.c.l.b16 %v415
    %v457 = vunpack.c.l.b16 %v416
    %v458 = vunpack.c.l.b16 %v417
    %v459 = vunpack.c.l.b16 %v418
    %v460 = vunpack.c.l.b16 %v419
    %v461 = vpack.c.b16 %v446, %v445
    %v462 = vpack.c.b16 %v448, %v447
    %v463 = vpack.c.b16 %v450, %v449
    %v464 = vpack.c.b16 %v452, %v451
    %v465 = vpack.c.b16 %v454, %v453
    %v466 = vpack.c.b16 %v456, %v455
    %v467 = vpack.c.b16 %v458, %v457
    %v468 = vpack.c.b16 %v460, %v459
    %477 = vmatprep.subr.bf16.mxu0 0
    %478 = vmatpush1.bf16.msra.mxu0 %v461
    %479 = vmatprep.subr.bf16.mxu0 0
    %480 = vmatpush1.bf16.msra.mxu0 %v462
    %481 = vmatprep.subr.bf16.mxu0 0
    %482 = vmatpush1.bf16.msra.mxu0 %v463
    %483 = vmatprep.subr.bf16.mxu0 0
    %484 = vmatpush1.bf16.msra.mxu0 %v464
    %485 = vmatprep.subr.bf16.mxu0 0
    %486 = vmatpush1.bf16.msra.mxu0 %v465
    %487 = vmatprep.subr.bf16.mxu0 0
    %488 = vmatpush1.bf16.msra.mxu0 %v466
    %489 = vmatprep.subr.bf16.mxu0 0
    %490 = vmatpush1.bf16.msra.mxu0 %v467
    %491 = vmatprep.subr.bf16.mxu0 0
    %492 = vmatpush1.bf16.msra.mxu0 %v468
    %493 = vmatprep.subr.bf16.mxu0 0
    %494 = vmatpush1.bf16.msra.mxu0 0
    %495 = vmatprep.subr.bf16.mxu0 0
    %496 = vmatpush1.bf16.msra.mxu0 0
    %497 = vmatprep.subr.bf16.mxu0 0
    %498 = vmatpush1.bf16.msra.mxu0 0
    %499 = vmatprep.subr.bf16.mxu0 0
    %500 = vmatpush1.bf16.msra.mxu0 0
    %501 = vmatprep.subr.bf16.mxu0 0
    %502 = vmatpush1.bf16.msra.mxu0 0
    %503 = vmatprep.subr.bf16.mxu0 0
    %504 = vmatpush1.bf16.msra.mxu0 0
    %505 = vmatprep.subr.bf16.mxu0 0
    %506 = vmatpush1.bf16.msra.mxu0 0
    %507 = vmatprep.subr.bf16.mxu0 0
    %508 = vmatpush1.bf16.msra.mxu0 0
    %509 = vmatprep.mubr.bf16.mxu0 0
    %510 = vmatmul.mubr.bf16.gmra.mrb[0].mxu0 %v422
    %v511 = vpop.f32.mrb[0].mxu0
    %v512 = vadd.f32 %v427, %v511
    %v513 = vpop.f32.mrb[0].mxu0
    %v514 = vpop.f32.mrb[0].mxu0
    %v515 = vpop.f32.mrb[0].mxu0
    %516 = vdwg.mxu0
    %v517 = vmax.f32 %v512, 0.0
    %s518 = scalar_lea.vmem [#allocation8], 256
    %v519 = vld [vmem:[%s518] sm:$0xf]
    %v520 = vld [vmem:[%s518 + $0x4] sm:$0xf]
    %v521 = vld [vmem:[%s518 + $0x8] sm:$0xf]
    %v522 = vld [vmem:[%s518 + $0xc] sm:$0xf]
    %v523 = vld [vmem:[%s518 + $0x10] sm:$0xf]
    %v524 = vld [vmem:[%s518 + $0x14] sm:$0xf]
    %v525 = vld [vmem:[%s518 + $0x18] sm:$0xf]
    %v526 = vld [vmem:[%s518 + $0x1c] sm:$0xf]
    %v527 = vld [vmem:[%s518 + $0x20] sm:$0xf]
    %v528 = vld [vmem:[%s518 + $0x24] sm:$0xf]
    %v529 = vld [vmem:[%s518 + $0x28] sm:$0xf]
    %v530 = vld [vmem:[%s518 + $0x2c] sm:$0xf]
    %v531 = vld [vmem:[%s518 + $0x30] sm:$0xf]
    %v532 = vld [vmem:[%s518 + $0x34] sm:$0xf]
    %v533 = vld [vmem:[%s518 + $0x38] sm:$0xf]
    %v534 = vld [vmem:[%s518 + $0x3c] sm:$0xf]
    %s535 = scalar_lea.vmem %s4, 4
    %v536 = vld [vmem:[%s535] sm:$0x1]
    %v537 = vpack.c.bf16 %v517, %v517
    %v539 = vlaneseq
    %v540 = vshrl.u32 %v539, 7
    %v541 = vsub.s32 0, %v540
    %v542 = vrot.slane %v536, %v541
    %v560 = vunpack.c.l.b16 %v519
    %v561 = vunpack.c.l.b16 %v520
    %v562 = vunpack.c.l.b16 %v521
    %v563 = vunpack.c.l.b16 %v522
    %v564 = vunpack.c.l.b16 %v523
    %v565 = vunpack.c.l.b16 %v524
    %v566 = vunpack.c.l.b16 %v525
    %v567 = vunpack.c.l.b16 %v526
    %v568 = vunpack.c.l.b16 %v527
    %v569 = vunpack.c.l.b16 %v528
    %v570 = vunpack.c.l.b16 %v529
    %v571 = vunpack.c.l.b16 %v530
    %v572 = vunpack.c.l.b16 %v531
    %v573 = vunpack.c.l.b16 %v532
    %v574 = vunpack.c.l.b16 %v533
    %v575 = vunpack.c.l.b16 %v534
    %v576 = vpack.c.b16 %v561, %v560
    %v577 = vpack.c.b16 %v563, %v562
    %v578 = vpack.c.b16 %v565, %v564
    %v579 = vpack.c.b16 %v567, %v566
    %v580 = vpack.c.b16 %v569, %v568
    %v581 = vpack.c.b16 %v571, %v570
    %v582 = vpack.c.b16 %v573, %v572
    %v583 = vpack.c.b16 %v575, %v574
    %592 = vmatprep.subr.bf16.mxu0 0
    %593 = vmatpush1.bf16.msra.mxu0 %v576
    %594 = vmatprep.subr.bf16.mxu0 0
    %595 = vmatpush1.bf16.msra.mxu0 %v577
    %596 = vmatprep.subr.bf16.mxu0 0
    %597 = vmatpush1.bf16.msra.mxu0 %v578
    %598 = vmatprep.subr.bf16.mxu0 0
    %599 = vmatpush1.bf16.msra.mxu0 %v579
    %600 = vmatprep.subr.bf16.mxu0 0
    %601 = vmatpush1.bf16.msra.mxu0 %v580
    %602 = vmatprep.subr.bf16.mxu0 0
    %603 = vmatpush1.bf16.msra.mxu0 %v581
    %604 = vmatprep.subr.bf16.mxu0 0
    %605 = vmatpush1.bf16.msra.mxu0 %v582
    %606 = vmatprep.subr.bf16.mxu0 0
    %607 = vmatpush1.bf16.msra.mxu0 %v583
    %608 = vmatprep.subr.bf16.mxu0 0
    %609 = vmatpush1.bf16.msra.mxu0 0
    %610 = vmatprep.subr.bf16.mxu0 0
    %611 = vmatpush1.bf16.msra.mxu0 0
    %612 = vmatprep.subr.bf16.mxu0 0
    %613 = vmatpush1.bf16.msra.mxu0 0
    %614 = vmatprep.subr.bf16.mxu0 0
    %615 = vmatpush1.bf16.msra.mxu0 0
    %616 = vmatprep.subr.bf16.mxu0 0
    %617 = vmatpush1.bf16.msra.mxu0 0
    %618 = vmatprep.subr.bf16.mxu0 0
    %619 = vmatpush1.bf16.msra.mxu0 0
    %620 = vmatprep.subr.bf16.mxu0 0
    %621 = vmatpush1.bf16.msra.mxu0 0
    %622 = vmatprep.subr.bf16.mxu0 0
    %623 = vmatpush1.bf16.msra.mxu0 0
    %624 = vmatprep.mubr.bf16.mxu0 0
    %625 = vmatmul.mubr.bf16.gmra.mrb[0].mxu0 %v537
    %v626 = vpop.f32.mrb[0].mxu0
    %v627 = vadd.f32 %v542, %v626
    %v628 = vpop.f32.mrb[0].mxu0
    %v629 = vpop.f32.mrb[0].mxu0
    %v630 = vpop.f32.mrb[0].mxu0
    %631 = vdwg.mxu0
    %v632 = vmax.f32 %v627, 0.0
    %s633 = scalar_lea.vmem [#allocation8], 320
    %v634 = vld [vmem:[%s633] sm:$0xf]
    %v635 = vld [vmem:[%s633 + $0x4] sm:$0xf]
    %v636 = vld [vmem:[%s633 + $0x8] sm:$0xf]
    %v637 = vld [vmem:[%s633 + $0xc] sm:$0xf]
    %v638 = vld [vmem:[%s633 + $0x10] sm:$0xf]
    %v639 = vld [vmem:[%s633 + $0x14] sm:$0xf]
    %v640 = vld [vmem:[%s633 + $0x18] sm:$0xf]
    %v641 = vld [vmem:[%s633 + $0x1c] sm:$0xf]
    %v642 = vld [vmem:[%s633 + $0x20] sm:$0xf]
    %v643 = vld [vmem:[%s633 + $0x24] sm:$0xf]
    %v644 = vld [vmem:[%s633 + $0x28] sm:$0xf]
    %v645 = vld [vmem:[%s633 + $0x2c] sm:$0xf]
    %v646 = vld [vmem:[%s633 + $0x30] sm:$0xf]
    %v647 = vld [vmem:[%s633 + $0x34] sm:$0xf]
    %v648 = vld [vmem:[%s633 + $0x38] sm:$0xf]
    %v649 = vld [vmem:[%s633 + $0x3c] sm:$0xf]
    %s650 = scalar_lea.vmem %s4, 5
    %v651 = vld [vmem:[%s650] sm:$0x1]
    %v652 = vpack.c.bf16 %v632, %v632
    %v654 = vlaneseq
    %v655 = vshrl.u32 %v654, 7
    %v656 = vsub.s32 0, %v655
    %v657 = vrot.slane %v651, %v656
    %v675 = vunpack.c.l.b16 %v634
    %v676 = vunpack.c.l.b16 %v635
    %v677 = vunpack.c.l.b16 %v636
    %v678 = vunpack.c.l.b16 %v637
    %v679 = vunpack.c.l.b16 %v638
    %v680 = vunpack.c.l.b16 %v639
    %v681 = vunpack.c.l.b16 %v640
    %v682 = vunpack.c.l.b16 %v641
    %v683 = vunpack.c.l.b16 %v642
    %v684 = vunpack.c.l.b16 %v643
    %v685 = vunpack.c.l.b16 %v644
    %v686 = vunpack.c.l.b16 %v645
    %v687 = vunpack.c.l.b16 %v646
    %v688 = vunpack.c.l.b16 %v647
    %v689 = vunpack.c.l.b16 %v648
    %v690 = vunpack.c.l.b16 %v649
    %v691 = vpack.c.b16 %v676, %v675
    %v692 = vpack.c.b16 %v678, %v677
    %v693 = vpack.c.b16 %v680, %v679
    %v694 = vpack.c.b16 %v682, %v681
    %v695 = vpack.c.b16 %v684, %v683
    %v696 = vpack.c.b16 %v686, %v685
    %v697 = vpack.c.b16 %v688, %v687
    %v698 = vpack.c.b16 %v690, %v689
    %707 = vmatprep.subr.bf16.mxu0 0
    %708 = vmatpush1.bf16.msra.mxu0 %v691
    %709 = vmatprep.subr.bf16.mxu0 0
    %710 = vmatpush1.bf16.msra.mxu0 %v692
    %711 = vmatprep.subr.bf16.mxu0 0
    %712 = vmatpush1.bf16.msra.mxu0 %v693
    %713 = vmatprep.subr.bf16.mxu0 0
    %714 = vmatpush1.bf16.msra.mxu0 %v694
    %715 = vmatprep.subr.bf16.mxu0 0
    %716 = vmatpush1.bf16.msra.mxu0 %v695
    %717 = vmatprep.subr.bf16.mxu0 0
    %718 = vmatpush1.bf16.msra.mxu0 %v696
    %719 = vmatprep.subr.bf16.mxu0 0
    %720 = vmatpush1.bf16.msra.mxu0 %v697
    %721 = vmatprep.subr.bf16.mxu0 0
    %722 = vmatpush1.bf16.msra.mxu0 %v698
    %723 = vmatprep.subr.bf16.mxu0 0
    %724 = vmatpush1.bf16.msra.mxu0 0
    %725 = vmatprep.subr.bf16.mxu0 0
    %726 = vmatpush1.bf16.msra.mxu0 0
    %727 = vmatprep.subr.bf16.mxu0 0
    %728 = vmatpush1.bf16.msra.mxu0 0
    %729 = vmatprep.subr.bf16.mxu0 0
    %730 = vmatpush1.bf16.msra.mxu0 0
    %731 = vmatprep.subr.bf16.mxu0 0
    %732 = vmatpush1.bf16.msra.mxu0 0
    %733 = vmatprep.subr.bf16.mxu0 0
    %734 = vmatpush1.bf16.msra.mxu0 0
    %735 = vmatprep.subr.bf16.mxu0 0
    %736 = vmatpush1.bf16.msra.mxu0 0
    %737 = vmatprep.subr.bf16.mxu0 0
    %738 = vmatpush1.bf16.msra.mxu0 0
    %739 = vmatprep.mubr.bf16.mxu0 0
    %740 = vmatmul.mubr.bf16.gmra.mrb[0].mxu0 %v652
    %v741 = vpop.f32.mrb[0].mxu0
    %v742 = vadd.f32 %v657, %v741
    %v743 = vpop.f32.mrb[0].mxu0
    %v744 = vpop.f32.mrb[0].mxu0
    %v745 = vpop.f32.mrb[0].mxu0
    %746 = vdwg.mxu0
    %v747 = vmax.f32 %v742, 0.0
    %s748 = scalar_lea.vmem [#allocation8], 384
    %v749 = vld [vmem:[%s748] sm:$0xf]
    %v750 = vld [vmem:[%s748 + $0x4] sm:$0xf]
    %v751 = vld [vmem:[%s748 + $0x8] sm:$0xf]
    %v752 = vld [vmem:[%s748 + $0xc] sm:$0xf]
    %v753 = vld [vmem:[%s748 + $0x10] sm:$0xf]
    %v754 = vld [vmem:[%s748 + $0x14] sm:$0xf]
    %v755 = vld [vmem:[%s748 + $0x18] sm:$0xf]
    %v756 = vld [vmem:[%s748 + $0x1c] sm:$0xf]
    %v757 = vld [vmem:[%s748 + $0x20] sm:$0xf]
    %v758 = vld [vmem:[%s748 + $0x24] sm:$0xf]
    %v759 = vld [vmem:[%s748 + $0x28] sm:$0xf]
    %v760 = vld [vmem:[%s748 + $0x2c] sm:$0xf]
    %v761 = vld [vmem:[%s748 + $0x30] sm:$0xf]
    %v762 = vld [vmem:[%s748 + $0x34] sm:$0xf]
    %v763 = vld [vmem:[%s748 + $0x38] sm:$0xf]
    %v764 = vld [vmem:[%s748 + $0x3c] sm:$0xf]
    %s765 = scalar_lea.vmem %s4, 6
    %v766 = vld [vmem:[%s765] sm:$0x1]
    %v767 = vpack.c.bf16 %v747, %v747
    %v769 = vlaneseq
    %v770 = vshrl.u32 %v769, 7
    %v771 = vsub.s32 0, %v770
    %v772 = vrot.slane %v766, %v771
    %v790 = vunpack.c.l.b16 %v749
    %v791 = vunpack.c.l.b16 %v750
    %v792 = vunpack.c.l.b16 %v751
    %v793 = vunpack.c.l.b16 %v752
    %v794 = vunpack.c.l.b16 %v753
    %v795 = vunpack.c.l.b16 %v754
    %v796 = vunpack.c.l.b16 %v755
    %v797 = vunpack.c.l.b16 %v756
    %v798 = vunpack.c.l.b16 %v757
    %v799 = vunpack.c.l.b16 %v758
    %v800 = vunpack.c.l.b16 %v759
    %v801 = vunpack.c.l.b16 %v760
    %v802 = vunpack.c.l.b16 %v761
    %v803 = vunpack.c.l.b16 %v762
    %v804 = vunpack.c.l.b16 %v763
    %v805 = vunpack.c.l.b16 %v764
    %v806 = vpack.c.b16 %v791, %v790
    %v807 = vpack.c.b16 %v793, %v792
    %v808 = vpack.c.b16 %v795, %v794
    %v809 = vpack.c.b16 %v797, %v796
    %v810 = vpack.c.b16 %v799, %v798
    %v811 = vpack.c.b16 %v801, %v800
    %v812 = vpack.c.b16 %v803, %v802
    %v813 = vpack.c.b16 %v805, %v804
    %822 = vmatprep.subr.bf16.mxu0 0
    %823 = vmatpush1.bf16.msra.mxu0 %v806
    %824 = vmatprep.subr.bf16.mxu0 0
    %825 = vmatpush1.bf16.msra.mxu0 %v807
    %826 = vmatprep.subr.bf16.mxu0 0
    %827 = vmatpush1.bf16.msra.mxu0 %v808
    %828 = vmatprep.subr.bf16.mxu0 0
    %829 = vmatpush1.bf16.msra.mxu0 %v809
    %830 = vmatprep.subr.bf16.mxu0 0
    %831 = vmatpush1.bf16.msra.mxu0 %v810
    %832 = vmatprep.subr.bf16.mxu0 0
    %833 = vmatpush1.bf16.msra.mxu0 %v811
    %834 = vmatprep.subr.bf16.mxu0 0
    %835 = vmatpush1.bf16.msra.mxu0 %v812
    %836 = vmatprep.subr.bf16.mxu0 0
    %837 = vmatpush1.bf16.msra.mxu0 %v813
    %838 = vmatprep.subr.bf16.mxu0 0
    %839 = vmatpush1.bf16.msra.mxu0 0
    %840 = vmatprep.subr.bf16.mxu0 0
    %841 = vmatpush1.bf16.msra.mxu0 0
    %842 = vmatprep.subr.bf16.mxu0 0
    %843 = vmatpush1.bf16.msra.mxu0 0
    %844 = vmatprep.subr.bf16.mxu0 0
    %845 = vmatpush1.bf16.msra.mxu0 0
    %846 = vmatprep.subr.bf16.mxu0 0
    %847 = vmatpush1.bf16.msra.mxu0 0
    %848 = vmatprep.subr.bf16.mxu0 0
    %849 = vmatpush1.bf16.msra.mxu0 0
    %850 = vmatprep.subr.bf16.mxu0 0
    %851 = vmatpush1.bf16.msra.mxu0 0
    %852 = vmatprep.subr.bf16.mxu0 0
    %853 = vmatpush1.bf16.msra.mxu0 0
    %854 = vmatprep.mubr.bf16.mxu0 0
    %855 = vmatmul.mubr.bf16.gmra.mrb[0].mxu0 %v767
    %v856 = vpop.f32.mrb[0].mxu0
    %v857 = vadd.f32 %v772, %v856
    %v858 = vpop.f32.mrb[0].mxu0
    %v859 = vpop.f32.mrb[0].mxu0
    %v860 = vpop.f32.mrb[0].mxu0
    %861 = vdwg.mxu0
    %v862 = vadd.f32 %v857, %v386
    %863 = vst [vmem:[%s5] sm:$0xff] %v862
    // Predicated region
    $region38: #{cvae_forward.1} parent=1 // pred_check
      _
    $region39: #{cvae_forward.1} parent=1 // pred_check_branch
      %865 = sbr.rel (0) target = $region41
    $region40: #{cvae_forward.1} parent=1 // pred_region
      _
    $region41: #{cvae_forward.1} parent=1 // pred_fallthru
      _
    // Predicated region
    $region42: #{cvae_forward.1} parent=1 // pred_check
      _
    $region43: #{cvae_forward.1} parent=1 // pred_check_branch
      %867 = sbr.rel (0) target = $region45
    $region44: #{cvae_forward.1} parent=1 // pred_region
      _
    $region45: #{cvae_forward.1} parent=1 // pred_fallthru
      _
    %868 = vsyncpa [#allocation4], 1
    %869 = vsyncpa [#allocation6], 1
    %870 = vsyncpa [#allocation9], 1

</llo_original>
